<compile_context>
chip_gen: v6e
topology: v6e:2x2x1
jax: 0.10.0
libtpu: 0.0.40
codegen_flags: <defaults>
</compile_context>

<pallas_src>
import functools

import jax
import jax.numpy as jnp
from jax.experimental import pallas as pl
from jax.experimental.pallas import tpu as pltpu

LANE = 128
SUBLANE = 8
MAX_TB = 2048


def _round_up(x, m):
    return ((x + m - 1) // m) * m


# ---------------------------------------------------------------------------
# Pallas kernel: fused 3-matmul MLP + tanh / softplus epilogue.
# Lanes [0, sigma_start) of the head slab are mu (identity), lanes
# [sigma_start, head_p) are sigma (softplus).
# ---------------------------------------------------------------------------
def actor_kernel(obs_ref, w1_ref, b1_ref, w2_ref, b2_ref, wh_ref, bh_ref,
                 out_ref, *, sigma_start):
    b1 = b1_ref[...]
    b2 = b2_ref[...]
    bh = bh_ref[...]

    wdt = w1_ref.dtype  # compute operand dtype (bf16 by default, MXU-native)

    # fc layer 1 + tanh (accumulate f32)
    h1 = jnp.tanh(
        jnp.dot(obs_ref[...].astype(wdt), w1_ref[...],
                preferred_element_type=jnp.float32) + b1)

    # fc layer 2 + tanh
    h2 = jnp.tanh(
        jnp.dot(h1.astype(wdt), w2_ref[...],
                preferred_element_type=jnp.float32) + b2)

    # Packed mu|sigma head: one matmul over the combined 128-lane weight slab.
    z = jnp.dot(h2.astype(wdt), wh_ref[...],
                preferred_element_type=jnp.float32) + bh

    # stable softplus: max(z,0) + log1p(exp(-|z|))
    sp = jnp.maximum(z, 0.0) + jnp.log1p(jnp.exp(-jnp.abs(z)))
    lane = jax.lax.broadcasted_iota(jnp.int32, z.shape, dimension=1)
    out_ref[...] = jnp.where(lane < sigma_start, z, sp)


# ---------------------------------------------------------------------------
# One-time parameter preparation (padding / head packing / dtype cast).
# Re-run only when the parameters change.
# ---------------------------------------------------------------------------
def prepare_params(params, weight_dtype=jnp.bfloat16):
    """Pads weights to lane-dense slabs and packs the mu|sigma head.

    Returns (arrays, meta) where arrays = (w1, b1, w2, b2, wh, bh) and meta
    holds static layout info used by actor_forward.
    """
    w1, b1, w2, b2, wmu, bmu, wsig, bsig = params
    in_dim, hidden_dim = w1.shape
    out_dim = wmu.shape[1]

    hid_p = _round_up(hidden_dim, LANE)
    if out_dim <= LANE // 2:
        sigma_start = LANE // 2          # mu + sigma packed into one 128 slab
    else:
        sigma_start = _round_up(out_dim, LANE)
    head_p = 2 * sigma_start

    def pad2(a, rows, cols, dtype):
        a = a.astype(jnp.float32)
        return jnp.pad(a, ((0, rows - a.shape[0]),
                           (0, cols - a.shape[1]))).astype(dtype)

    w1_p = pad2(w1, in_dim, hid_p, weight_dtype)
    b1_p = pad2(b1, 1, hid_p, jnp.float32)
    w2_p = pad2(w2, hid_p, hid_p, weight_dtype)
    b2_p = pad2(b2, 1, hid_p, jnp.float32)
    wh_p = jnp.concatenate(
        [pad2(wmu, hid_p, sigma_start, jnp.float32),
         pad2(wsig, hid_p, head_p - sigma_start, jnp.float32)],
        axis=1).astype(weight_dtype)
    bh_p = jnp.concatenate(
        [pad2(bmu, 1, sigma_start, jnp.float32),
         pad2(bsig, 1, head_p - sigma_start, jnp.float32)], axis=1)

    meta = dict(in_dim=in_dim, out_dim=out_dim, hid_p=hid_p,
                head_p=head_p, sigma_start=sigma_start)
    return (w1_p, b1_p, w2_p, b2_p, wh_p, bh_p), meta


def _choose_batch_tile(batch):
    """Pick (tb, batch_p): tb multiple of 8, minimal padding, >=2 grid steps
    when cleanly possible (so v7x can shard the parallel axis over 2 TCs)."""
    batch8 = _round_up(max(batch, 1), SUBLANE)
    if batch8 <= MAX_TB:
        if batch8 >= 256 and batch8 % 16 == 0:
            return batch8 // 2, batch8
        return batch8, batch8
    best_tb, best_bp = None, None
    for cand in (MAX_TB, 1024, 512, 256):
        bp = _round_up(batch8, cand)
        if best_bp is None or bp < best_bp:
            best_tb, best_bp = cand, bp
    return best_tb, best_bp


# ---------------------------------------------------------------------------
# Per-call wrapper: pad batch axis only, launch the batch-tiled grid, trim.
# ---------------------------------------------------------------------------
def actor_forward(obs, prepared):
    """Fused ActorNN forward pass. Returns (mu, sigma)."""
    arrays, meta = prepared
    w1_p, b1_p, w2_p, b2_p, wh_p, bh_p = arrays
    in_dim = meta["in_dim"]
    out_dim = meta["out_dim"]
    hid_p = meta["hid_p"]
    head_p = meta["head_p"]
    sigma_start = meta["sigma_start"]

    batch = obs.shape[0]
    assert obs.shape[1] == in_dim

    tb, batch_p = _choose_batch_tile(batch)
    obs_f = obs.astype(jnp.float32)
    if batch_p != batch:
        obs_f = jnp.pad(obs_f, ((0, batch_p - batch), (0, 0)))

    grid = (batch_p // tb,)
    kernel = functools.partial(actor_kernel, sigma_start=sigma_start)

    flops = 2 * batch_p * (in_dim * hid_p + hid_p * hid_p + hid_p * head_p)
    transcendentals = batch_p * (2 * hid_p + head_p)
    bytes_accessed = (obs_f.size * 4
                      + sum(int(a.size) * a.dtype.itemsize for a in arrays)
                      + batch_p * head_p * 4)

    out = pl.pallas_call(
        kernel,
        out_shape=jax.ShapeDtypeStruct((batch_p, head_p), jnp.float32),
        grid=grid,
        in_specs=[
            pl.BlockSpec((tb, in_dim), lambda i: (i, 0)),       # obs (row-tiled)
            pl.BlockSpec((in_dim, hid_p), lambda i: (0, 0)),    # W1 (resident)
            pl.BlockSpec((1, hid_p), lambda i: (0, 0)),         # b1
            pl.BlockSpec((hid_p, hid_p), lambda i: (0, 0)),     # W2
            pl.BlockSpec((1, hid_p), lambda i: (0, 0)),         # b2
            pl.BlockSpec((hid_p, head_p), lambda i: (0, 0)),    # W_mu|W_sigma
            pl.BlockSpec((1, head_p), lambda i: (0, 0)),        # b_mu|b_sigma
        ],
        out_specs=pl.BlockSpec((tb, head_p), lambda i: (i, 0)),
        compiler_params=pltpu.CompilerParams(
            dimension_semantics=("parallel",),
            vmem_limit_bytes=64 * 1024 * 1024),
        cost_estimate=pl.CostEstimate(
            flops=flops,
            transcendentals=transcendentals,
            bytes_accessed=bytes_accessed),
    )(obs_f, w1_p, b1_p, w2_p, b2_p, wh_p, bh_p)

    mu = out[:batch, :out_dim]
    sigma = out[:batch, sigma_start:sigma_start + out_dim]
    return mu, sigma


# ---------------------------------------------------------------------------
# Deterministic parameter initialization (mirrors layer_init semantics).
# Weights stored (in_features, out_features), i.e. transposed vs PyTorch.
# ---------------------------------------------------------------------------
def orthogonal_init(key, in_dim, out_dim, std):
    a = jax.random.normal(key, (max(in_dim, out_dim), min(in_dim, out_dim)),
                          dtype=jnp.float32)
    q, r = jnp.linalg.qr(a)
    q = q * jnp.sign(jnp.diag(r))
    if in_dim < out_dim:
        q = q.T
    return std * q[:in_dim, :out_dim]


def make_params(key, in_dim, hidden_dim, out_dim):
    k1, k2, k3, k4, k5 = jax.random.split(key, 5)
    sqrt2 = jnp.sqrt(2.0)

    w1 = orthogonal_init(k1, in_dim, hidden_dim, sqrt2)
    b1 = jnp.zeros((1, hidden_dim), jnp.float32)

    w2 = orthogonal_init(k2, hidden_dim, hidden_dim, sqrt2)
    b2 = jnp.zeros((1, hidden_dim), jnp.float32)

    wmu = orthogonal_init(k3, hidden_dim, out_dim, 0.01)
    bmu = jnp.zeros((1, out_dim), jnp.float32)

    # sigma head uses default nn.Linear init (uniform +/- 1/sqrt(fan_in))
    bound = 1.0 / jnp.sqrt(jnp.float32(hidden_dim))
    wsig = jax.random.uniform(k4, (hidden_dim, out_dim), jnp.float32,
                              minval=-bound, maxval=bound)
    bsig = jax.random.uniform(k5, (1, out_dim), jnp.float32,
                              minval=-bound, maxval=bound)

    return (w1, b1, w2, b2, wmu, bmu, wsig, bsig)


# ---------------------------------------------------------------------------
# Pure-JAX f32 reference.
# ---------------------------------------------------------------------------
def actor_forward_ref(obs, params):
    (w1, b1, w2, b2, wmu, bmu, wsig, bsig) = params
    h1 = jnp.tanh(obs @ w1 + b1)
    h2 = jnp.tanh(h1 @ w2 + b2)
    mu = h2 @ wmu + bmu
    sigma = jax.nn.softplus(h2 @ wsig + bsig)
    return mu, sigma


if __name__ == "__main__":
    in_dim, hidden_dim, out_dim = 16, 32, 4
    batch = 8

    key = jax.random.PRNGKey(0)
    k_obs, k_params = jax.random.split(key)

    obs = jax.random.normal(k_obs, (batch, in_dim), dtype=jnp.float32)
    params = make_params(k_params, in_dim, hidden_dim, out_dim)
    mu_ref, sigma_ref = actor_forward_ref(obs, params)

    # f32-stored weights: tight tolerance.
    prepared_f32 = prepare_params(params, weight_dtype=jnp.float32)
    mu32, sg32 = jax.block_until_ready(actor_forward(obs, prepared_f32))
    assert mu32.shape == (batch, out_dim) and sg32.shape == (batch, out_dim)
    assert jnp.allclose(mu32, mu_ref, atol=1e-5, rtol=1e-5)
    assert jnp.allclose(sg32, sigma_ref, atol=1e-5, rtol=1e-5)

    # bf16-stored weights (default fast path): looser tolerance.
    prepared_bf16 = prepare_params(params)  # weight_dtype=bf16
    mu, sigma = jax.block_until_ready(actor_forward(obs, prepared_bf16))
    assert mu.shape == (batch, out_dim) and sigma.shape == (batch, out_dim)
    assert jnp.allclose(mu, mu_ref, atol=2e-2, rtol=2e-2)
    assert jnp.allclose(sigma, sigma_ref, atol=2e-2, rtol=2e-2)
    assert bool(jnp.all(sigma > 0.0))

    # Non-multiple-of-8 batch exercises the batch-padding path.
    obs2 = jax.random.normal(jax.random.PRNGKey(1), (10, in_dim), jnp.float32)
    mu2, sg2 = jax.block_until_ready(actor_forward(obs2, prepared_bf16))
    mu2_ref, sg2_ref = actor_forward_ref(obs2, params)
    assert mu2.shape == (10, out_dim) and sg2.shape == (10, out_dim)
    assert jnp.allclose(mu2, mu2_ref, atol=2e-2, rtol=2e-2)
    assert jnp.allclose(sg2, sg2_ref, atol=2e-2, rtol=2e-2)

    print("KERNEL_OK")
</pallas_src>

<mosaic_0001>
module attributes {stable_mosaic.version = 11 : i64} {
  func.func @actor_kernel(%arg0: i32, %arg1: memref<8x16xf32, #tpu.memory_space<vmem>>, %arg2: memref<16x128xf32, #tpu.memory_space<vmem>>, %arg3: memref<1x128xf32, #tpu.memory_space<vmem>>, %arg4: memref<128x128xf32, #tpu.memory_space<vmem>>, %arg5: memref<1x128xf32, #tpu.memory_space<vmem>>, %arg6: memref<128x128xf32, #tpu.memory_space<vmem>>, %arg7: memref<1x128xf32, #tpu.memory_space<vmem>>, %arg8: memref<8x128xf32, #tpu.memory_space<vmem>>) attributes {dimension_semantics = [#tpu.dimension_semantics<parallel>], iteration_bounds = array<i64: 1>, scalar_prefetch = 0 : i64, scratch_operands = 0 : i64, tpu.core_type = #tpu.core_type<tc>, window_params = [{transform_indices = @transform_0, window_bounds = array<i64: 8, 16>}, {pipeline_mode = #tpu.pipeline_mode<synchronous>, transform_indices = @transform_1, window_bounds = array<i64: 16, 128>}, {pipeline_mode = #tpu.pipeline_mode<synchronous>, transform_indices = @transform_2, window_bounds = array<i64: 1, 128>}, {pipeline_mode = #tpu.pipeline_mode<synchronous>, transform_indices = @transform_3, window_bounds = array<i64: 128, 128>}, {pipeline_mode = #tpu.pipeline_mode<synchronous>, transform_indices = @transform_4, window_bounds = array<i64: 1, 128>}, {pipeline_mode = #tpu.pipeline_mode<synchronous>, transform_indices = @transform_5, window_bounds = array<i64: 128, 128>}, {pipeline_mode = #tpu.pipeline_mode<synchronous>, transform_indices = @transform_6, window_bounds = array<i64: 1, 128>}, {transform_indices = @transform_7, window_bounds = array<i64: 8, 128>}]} {
    %c0 = arith.constant 0 : index
    %c0_0 = arith.constant 0 : index
    %0 = vector.load %arg3[%c0, %c0_0] : memref<1x128xf32, #tpu.memory_space<vmem>>, vector<1x128xf32>
    %c0_1 = arith.constant 0 : index
    %c0_2 = arith.constant 0 : index
    %1 = vector.load %arg5[%c0_1, %c0_2] : memref<1x128xf32, #tpu.memory_space<vmem>>, vector<1x128xf32>
    %c0_3 = arith.constant 0 : index
    %c0_4 = arith.constant 0 : index
    %2 = vector.load %arg7[%c0_3, %c0_4] : memref<1x128xf32, #tpu.memory_space<vmem>>, vector<1x128xf32>
    %c0_5 = arith.constant 0 : index
    %c0_6 = arith.constant 0 : index
    %3 = vector.load %arg1[%c0_5, %c0_6] : memref<8x16xf32, #tpu.memory_space<vmem>>, vector<8x16xf32>
    %c0_7 = arith.constant 0 : index
    %c0_8 = arith.constant 0 : index
    %4 = vector.load %arg2[%c0_7, %c0_8] : memref<16x128xf32, #tpu.memory_space<vmem>>, vector<16x128xf32>
    %cst = arith.constant dense<0.000000e+00> : vector<8x128xf32>
    %5 = tpu.matmul %3, %4, %cst {dimension_numbers = #tpu.dot_dimension_numbers<[1], [0], [0], [1], [0, 0, 1, 1], [], []>} : vector<8x16xf32>, vector<16x128xf32>, vector<8x128xf32> -> vector<8x128xf32>
    %6 = vector.broadcast %0 : vector<1x128xf32> to vector<8x128xf32>
    %7 = arith.addf %5, %6 : vector<8x128xf32>
    %8 = math.tanh %7 : vector<8x128xf32>
    %c0_9 = arith.constant 0 : index
    %c0_10 = arith.constant 0 : index
    %9 = vector.load %arg4[%c0_9, %c0_10] : memref<128x128xf32, #tpu.memory_space<vmem>>, vector<128x128xf32>
    %cst_11 = arith.constant dense<0.000000e+00> : vector<8x128xf32>
    %10 = tpu.matmul %8, %9, %cst_11 {dimension_numbers = #tpu.dot_dimension_numbers<[1], [0], [0], [1], [0, 0, 1, 1], [], []>} : vector<8x128xf32>, vector<128x128xf32>, vector<8x128xf32> -> vector<8x128xf32>
    %11 = vector.broadcast %1 : vector<1x128xf32> to vector<8x128xf32>
    %12 = arith.addf %10, %11 : vector<8x128xf32>
    %13 = math.tanh %12 : vector<8x128xf32>
    %c0_12 = arith.constant 0 : index
    %c0_13 = arith.constant 0 : index
    %14 = vector.load %arg6[%c0_12, %c0_13] : memref<128x128xf32, #tpu.memory_space<vmem>>, vector<128x128xf32>
    %cst_14 = arith.constant dense<0.000000e+00> : vector<8x128xf32>
    %15 = tpu.matmul %13, %14, %cst_14 {dimension_numbers = #tpu.dot_dimension_numbers<[1], [0], [0], [1], [0, 0, 1, 1], [], []>} : vector<8x128xf32>, vector<128x128xf32>, vector<8x128xf32> -> vector<8x128xf32>
    %16 = vector.broadcast %2 : vector<1x128xf32> to vector<8x128xf32>
    %17 = arith.addf %15, %16 : vector<8x128xf32>
    %cst_15 = arith.constant 0.000000e+00 : f32
    %18 = vector.broadcast %cst_15 : f32 to vector<8x128xf32>
    %19 = arith.maximumf %17, %18 : vector<8x128xf32>
    %20 = math.absf %17 : vector<8x128xf32>
    %cst_16 = arith.constant 0.000000e+00 : f32
    %21 = vector.broadcast %cst_16 : f32 to vector<8x128xf32>
    %22 = arith.subf %21, %20 : vector<8x128xf32>
    %23 = math.exp %22 : vector<8x128xf32>
    %24 = math.log1p %23 : vector<8x128xf32>
    %25 = arith.addf %19, %24 : vector<8x128xf32>
    %26 = tpu.iota {dimensions = array<i32: 1>} : vector<8x128xi32>
    %c64_i32 = arith.constant 64 : i32
    %27 = vector.broadcast %c64_i32 : i32 to vector<8x128xi32>
    %28 = arith.cmpi slt, %26, %27 : vector<8x128xi32>
    %29 = arith.select %28, %17, %25 : vector<8x128xi1>, vector<8x128xf32>
    %c0_17 = arith.constant 0 : index
    %c0_18 = arith.constant 0 : index
    %30 = vector.load %arg8[%c0_17, %c0_18] : memref<8x128xf32, #tpu.memory_space<vmem>>, vector<8x128xf32>
    tpu.vector_store %arg8[%c0_17, %c0_18], %29 {strides = array<i32>} : memref<8x128xf32, #tpu.memory_space<vmem>>, vector<8x128xf32>,
    return
  }
  func.func @transform_0(%arg0: i32) -> (i32, i32) {
    %c0_i32 = arith.constant 0 : i32
    %c0_i32_0 = arith.constant 0 : i32
    return %arg0, %c0_i32 : i32, i32
  }
  func.func @transform_1(%arg0: i32) -> (i32, i32) {
    %c0_i32 = arith.constant 0 : i32
    %c0_i32_0 = arith.constant 0 : i32
    %c0_i32_1 = arith.constant 0 : i32
    return %c0_i32, %c0_i32_0 : i32, i32
  }
  func.func @transform_2(%arg0: i32) -> (i32, i32) {
    %c0_i32 = arith.constant 0 : i32
    %c0_i32_0 = arith.constant 0 : i32
    %c0_i32_1 = arith.constant 0 : i32
    return %c0_i32, %c0_i32_0 : i32, i32
  }
  func.func @transform_3(%arg0: i32) -> (i32, i32) {
    %c0_i32 = arith.constant 0 : i32
    %c0_i32_0 = arith.constant 0 : i32
    %c0_i32_1 = arith.constant 0 : i32
    return %c0_i32, %c0_i32_0 : i32, i32
  }
  func.func @transform_4(%arg0: i32) -> (i32, i32) {
    %c0_i32 = arith.constant 0 : i32
    %c0_i32_0 = arith.constant 0 : i32
    %c0_i32_1 = arith.constant 0 : i32
    return %c0_i32, %c0_i32_0 : i32, i32
  }
  func.func @transform_5(%arg0: i32) -> (i32, i32) {
    %c0_i32 = arith.constant 0 : i32
    %c0_i32_0 = arith.constant 0 : i32
    %c0_i32_1 = arith.constant 0 : i32
    return %c0_i32, %c0_i32_0 : i32, i32
  }
  func.func @transform_6(%arg0: i32) -> (i32, i32) {
    %c0_i32 = arith.constant 0 : i32
    %c0_i32_0 = arith.constant 0 : i32
    %c0_i32_1 = arith.constant 0 : i32
    return %c0_i32, %c0_i32_0 : i32, i32
  }
  func.func @transform_7(%arg0: i32) -> (i32, i32) {
    %c0_i32 = arith.constant 0 : i32
    %c0_i32_0 = arith.constant 0 : i32
    return %arg0, %c0_i32 : i32, i32
  }
}

</mosaic_0001>

<llo_original>
// kernel: tpu_custom_call.1
$region0: #{tpu_custom_call.1}
  #allocation0 [shape = 'u32[]', space=smem, size = 0x4, offset = 0x4, fixed_abs, tag = 'smem constant byte address 0x4 - core index']
  #allocation1 [shape = 'u32[144,128]{1,0:T(1,128)}', space=vmem, size = 0x12000, scoped, tag = 'internal scratch']
  %s0 = inlined_call_operand.hbm [shape: f32[8,16], index: 0, kind: input, shape index: {}]
  %s1 = inlined_call_operand.hbm [shape: f32[16,128], index: 1, kind: input, shape index: {}]
  %s2 = inlined_call_operand.vmem [shape: f32[1,128], index: 2, kind: input, shape index: {}]
  %s3 = inlined_call_operand.hbm [shape: f32[128,128], index: 3, kind: input, shape index: {}]
  %s4 = inlined_call_operand.vmem [shape: f32[1,128], index: 4, kind: input, shape index: {}]
  %s5 = inlined_call_operand.hbm [shape: f32[128,128], index: 5, kind: input, shape index: {}]
  %s6 = inlined_call_operand.vmem [shape: f32[1,128], index: 6, kind: input, shape index: {}]
  %s7 = inlined_call_operand.hbm [shape: f32[8,128], index: 7, kind: output, shape index: {}]
  %s8 = sld [smem:[#allocation0]]
  $region54: #{tpu_custom_call.1} parent=0
    _
  %s10 = ssub.s32 1, %s8
  %s11 = scalar_select 0, %s10, %s8
  $region1: #{tpu_custom_call.1} parent=0
    #allocation2 [shape = 'u8[4096]{0}', space=vmem, size = 0x1000, scoped, tag = 'input window, operand 0, single buffered']
    #allocation3 [shape = 's32[1]{0}', space=sflag, size = 0x4, scoped, tag = 'scoped memory for tpu_custom_call.1']
    #allocation4 [shape = 's32[1]{0}', space=sflag, size = 0x4, scoped, tag = 'scoped memory for tpu_custom_call.1']
    #allocation5 [shape = 'u8[8192]{0}', space=vmem, size = 0x2000, scoped, tag = 'input window, operand 1, single buffered']
    #allocation6 [shape = 's32[1]{0}', space=sflag, size = 0x4, scoped, tag = 'scoped memory for tpu_custom_call.1']
    #allocation7 [shape = 'u8[65536]{0}', space=vmem, size = 0x10000, scoped, tag = 'input window, operand 3, single buffered']
    #allocation8 [shape = 'u8[65536]{0}', space=vmem, size = 0x10000, scoped, tag = 'input window, operand 5, single buffered']
    #allocation9 [shape = 's32[1]{0}', space=sflag, size = 0x4, scoped, tag = 'scoped memory for tpu_custom_call.1']
    #allocation10 [shape = 'u8[4096]{0}', space=vmem, size = 0x1000, scoped, tag = 'output window, operand 0, single buffered']
    %12 = vsyncpa [#allocation3], 0
    %13 = vsyncpa [#allocation6], 0
    %14 = vsyncpa [#allocation9], 0
    %15 = vsyncpa [#allocation4], 0
    // Predicated region
    $region2: #{tpu_custom_call.1} parent=1 // pred_check
      _
    $region3: #{tpu_custom_call.1} parent=1 // pred_check_branch
      %17 = sbr.rel (0) target = $region5
    $region4: #{tpu_custom_call.1} parent=1 // pred_region
      %s19 = ssub.s32 128, 128
      %20 = vsyncadd [#allocation3], %s19
      %s22 = sshll.u32 [#allocation2], 4
      %s23 = int_to_ptr.vmem [resolvable:$true] %s22
      %25 = dma.hbm_to_vmem [thread:$0]  %s0, 128, %s23, [#allocation3]
    $region5: #{tpu_custom_call.1} parent=1 // pred_fallthru
      _
    // Predicated region
    $region6: #{tpu_custom_call.1} parent=1 // pred_check
      _
    $region7: #{tpu_custom_call.1} parent=1 // pred_check_branch
      %27 = sbr.rel (0) target = $region9
    $region8: #{tpu_custom_call.1} parent=1 // pred_region
      %s29 = ssub.s32 256, 256
      %30 = vsyncadd [#allocation6], %s29
      %s31 = sshll.u32 [#allocation5], 4
      %s32 = int_to_ptr.vmem [resolvable:$true] %s31
      %37 = dma.hbm_to_vmem [thread:$0]  %s1, 256, %s32, [#allocation6], 128, 128, 8
    $region9: #{tpu_custom_call.1} parent=1 // pred_fallthru
      _
    // Predicated region
    $region10: #{tpu_custom_call.1} parent=1 // pred_check
      _
    $region11: #{tpu_custom_call.1} parent=1 // pred_check_branch
      %39 = sbr.rel (0) target = $region13
    $region12: #{tpu_custom_call.1} parent=1 // pred_region
      _
    $region13: #{tpu_custom_call.1} parent=1 // pred_fallthru
      _
    // Predicated region
    $region14: #{tpu_custom_call.1} parent=1 // pred_check
      _
    $region15: #{tpu_custom_call.1} parent=1 // pred_check_branch
      %41 = sbr.rel (0) target = $region17
    $region16: #{tpu_custom_call.1} parent=1 // pred_region
      %s43 = ssub.s32 2048, 2048
      %44 = vsyncadd [#allocation6], %s43
      %s45 = sshll.u32 [#allocation7], 4
      %s46 = int_to_ptr.vmem [resolvable:$true] %s45
      %51 = dma.hbm_to_vmem [thread:$0]  %s3, 2048, %s46, [#allocation6], 128, 128, 8
    $region17: #{tpu_custom_call.1} parent=1 // pred_fallthru
      _
    // Predicated region
    $region18: #{tpu_custom_call.1} parent=1 // pred_check
      _
    $region19: #{tpu_custom_call.1} parent=1 // pred_check_branch
      %53 = sbr.rel (0) target = $region21
    $region20: #{tpu_custom_call.1} parent=1 // pred_region
      _
    $region21: #{tpu_custom_call.1} parent=1 // pred_fallthru
      _
    // Predicated region
    $region22: #{tpu_custom_call.1} parent=1 // pred_check
      _
    $region23: #{tpu_custom_call.1} parent=1 // pred_check_branch
      %55 = sbr.rel (0) target = $region25
    $region24: #{tpu_custom_call.1} parent=1 // pred_region
      %s57 = ssub.s32 2048, 2048
      %58 = vsyncadd [#allocation9], %s57
      %s59 = sshll.u32 [#allocation8], 4
      %s60 = int_to_ptr.vmem [resolvable:$true] %s59
      %65 = dma.hbm_to_vmem [thread:$0]  %s5, 2048, %s60, [#allocation9], 128, 128, 8
    $region25: #{tpu_custom_call.1} parent=1 // pred_fallthru
      _
    // Predicated region
    $region26: #{tpu_custom_call.1} parent=1 // pred_check
      _
    $region27: #{tpu_custom_call.1} parent=1 // pred_check_branch
      %67 = sbr.rel (0) target = $region29
    $region28: #{tpu_custom_call.1} parent=1 // pred_region
      _
    $region29: #{tpu_custom_call.1} parent=1 // pred_fallthru
      _
    // Predicated region
    $region30: #{tpu_custom_call.1} parent=1 // pred_check
      _
    $region31: #{tpu_custom_call.1} parent=1 // pred_check_branch
      %69 = sbr.rel (0) target = $region33
    $region32: #{tpu_custom_call.1} parent=1 // pred_region
      %70 = dma.done [#allocation3], 128
    $region33: #{tpu_custom_call.1} parent=1 // pred_fallthru
      _
    // Predicated region
    $region34: #{tpu_custom_call.1} parent=1 // pred_check
      _
    $region35: #{tpu_custom_call.1} parent=1 // pred_check_branch
      %72 = sbr.rel (0) target = $region37
    $region36: #{tpu_custom_call.1} parent=1 // pred_region
      %73 = dma.done [#allocation6], 256
    $region37: #{tpu_custom_call.1} parent=1 // pred_fallthru
      _
    // Predicated region
    $region38: #{tpu_custom_call.1} parent=1 // pred_check
      _
    $region39: #{tpu_custom_call.1} parent=1 // pred_check_branch
      %75 = sbr.rel (0) target = $region41
    $region40: #{tpu_custom_call.1} parent=1 // pred_region
      %76 = dma.done [#allocation6], 2048
    $region41: #{tpu_custom_call.1} parent=1 // pred_fallthru
      _
    // Predicated region
    $region42: #{tpu_custom_call.1} parent=1 // pred_check
      _
    $region43: #{tpu_custom_call.1} parent=1 // pred_check_branch
      %78 = sbr.rel (0) target = $region45
    $region44: #{tpu_custom_call.1} parent=1 // pred_region
      %79 = dma.done [#allocation9], 2048
    $region45: #{tpu_custom_call.1} parent=1 // pred_fallthru
      _
    %v80 = vld [vmem:[%s2] sm:$0x1]
    %v81 = vld [vmem:[%s4] sm:$0x1]
    %v82 = vld [vmem:[%s6] sm:$0x1]
    %v83 = vld [vmem:[#allocation2] sm:$0xff]
    %v84 = vld [vmem:[#allocation5] sm:$0xff]
    %v85 = vld [vmem:[#allocation5 + $0x8] sm:$0xff]
    %v87 = vlaneseq
    %v88 = vshrl.u32 %v87, 7
    %v89 = vsub.s32 0, %v88
    %v90 = vrot.slane %v80, %v89
    %vm92 = vcmask 130048
    %v94 = vsel %vm92, %v83, 0
    %96 = vmatprep.subr.mxu0 0.0
    %97 = vmatpush1.msra.mxu0 0.0
    %98 = vmatprep.subr.mxu0 0.0
    %99 = vmatpush1.msra.mxu0 0.0
    %100 = vmatprep.subr.mxu0 0.0
    %101 = vmatpush1.msra.mxu0 0.0
    %102 = vmatprep.subr.mxu0 0.0
    %103 = vmatpush1.msra.mxu0 0.0
    %104 = vmatprep.subr.mxu0 0.0
    %105 = vmatpush1.msra.mxu0 0.0
    %106 = vmatprep.subr.mxu0 0.0
    %107 = vmatpush1.msra.mxu0 0.0
    %108 = vmatprep.subr.mxu0 0.0
    %109 = vmatpush1.msra.mxu0 0.0
    %110 = vmatprep.subr.mxu0 0.0
    %111 = vmatpush1.msra.mxu0 0.0
    %112 = vmatprep.subr.mxu0 0.0
    %113 = vmatpush1.msra.mxu0 0.0
    %114 = vmatprep.subr.mxu0 0.0
    %115 = vmatpush1.msra.mxu0 0.0
    %116 = vmatprep.subr.mxu0 0.0
    %117 = vmatpush1.msra.mxu0 0.0
    %118 = vmatprep.subr.mxu0 0.0
    %119 = vmatpush1.msra.mxu0 0.0
    %120 = vmatprep.subr.mxu0 0.0
    %121 = vmatpush1.msra.mxu0 0.0
    %122 = vmatprep.subr.mxu0 0.0
    %123 = vmatpush1.msra.mxu0 0.0
    %124 = vmatprep.subr.mxu0 0.0
    %125 = vmatpush1.msra.mxu0 %v85
    %126 = vmatprep.subr.mxu0 0.0
    %127 = vmatpush1.msra.mxu0 %v84
    %128 = vmatprep.subr.mxu0 0.0
    %129 = vmatpush2.msra.mxu0 0.0
    %130 = vmatprep.subr.mxu0 0.0
    %131 = vmatpush2.msra.mxu0 0.0
    %132 = vmatprep.subr.mxu0 0.0
    %133 = vmatpush2.msra.mxu0 0.0
    %134 = vmatprep.subr.mxu0 0.0
    %135 = vmatpush2.msra.mxu0 0.0
    %136 = vmatprep.subr.mxu0 0.0
    %137 = vmatpush2.msra.mxu0 0.0
    %138 = vmatprep.subr.mxu0 0.0
    %139 = vmatpush2.msra.mxu0 0.0
    %140 = vmatprep.subr.mxu0 0.0
    %141 = vmatpush2.msra.mxu0 0.0
    %142 = vmatprep.subr.mxu0 0.0
    %143 = vmatpush2.msra.mxu0 0.0
    %144 = vmatprep.subr.mxu0 0.0
    %145 = vmatpush2.msra.mxu0 0.0
    %146 = vmatprep.subr.mxu0 0.0
    %147 = vmatpush2.msra.mxu0 0.0
    %148 = vmatprep.subr.mxu0 0.0
    %149 = vmatpush2.msra.mxu0 0.0
    %150 = vmatprep.subr.mxu0 0.0
    %151 = vmatpush2.msra.mxu0 0.0
    %152 = vmatprep.subr.mxu0 0.0
    %153 = vmatpush2.msra.mxu0 0.0
    %154 = vmatprep.subr.mxu0 0.0
    %155 = vmatpush2.msra.mxu0 0.0
    %156 = vmatprep.subr.mxu0 0.0
    %157 = vmatpush2.msra.mxu0 0.0
    %158 = vmatprep.subr.mxu0 0.0
    %159 = vmatpush2.msra.mxu0 0.0
    %160 = vmatprep.mubr.f32.mxu0 0.0
    %161 = vmatmul.mubr.f32.gmra.mxu0 %v94
    %v162 = vpop.f32.mrf.mxu0
    %v163 = vadd.f32 %v90, %v162
    %v164 = vpop.f32.mrf.mxu0
    %165 = vdwg.mxu0
    %v166 = vtanh.pop %v163
    %v167 = vld [vmem:[#allocation7] sm:$0xff]
    %v168 = vld [vmem:[#allocation7 + $0x8] sm:$0xff]
    %v169 = vld [vmem:[#allocation7 + $0x10] sm:$0xff]
    %v170 = vld [vmem:[#allocation7 + $0x18] sm:$0xff]
    %v171 = vld [vmem:[#allocation7 + $0x20] sm:$0xff]
    %v172 = vld [vmem:[#allocation7 + $0x28] sm:$0xff]
    %v173 = vld [vmem:[#allocation7 + $0x30] sm:$0xff]
    %v174 = vld [vmem:[#allocation7 + $0x38] sm:$0xff]
    %v175 = vld [vmem:[#allocation7 + $0x40] sm:$0xff]
    %v176 = vld [vmem:[#allocation7 + $0x48] sm:$0xff]
    %v177 = vld [vmem:[#allocation7 + $0x50] sm:$0xff]
    %v178 = vld [vmem:[#allocation7 + $0x58] sm:$0xff]
    %v179 = vld [vmem:[#allocation7 + $0x60] sm:$0xff]
    %v180 = vld [vmem:[#allocation7 + $0x68] sm:$0xff]
    %v181 = vld [vmem:[#allocation7 + $0x70] sm:$0xff]
    %v182 = vld [vmem:[#allocation7 + $0x78] sm:$0xff]
    %v184 = vlaneseq
    %v185 = vshrl.u32 %v184, 7
    %v186 = vsub.s32 0, %v185
    %v187 = vrot.slane %v81, %v186
    %189 = vmatprep.subr.mxu0 0.0
    %190 = vmatpush1.msra.mxu0 %v182
    %191 = vmatprep.subr.mxu0 0.0
    %192 = vmatpush1.msra.mxu0 %v181
    %193 = vmatprep.subr.mxu0 0.0
    %194 = vmatpush1.msra.mxu0 %v180
    %195 = vmatprep.subr.mxu0 0.0
    %196 = vmatpush1.msra.mxu0 %v179
    %197 = vmatprep.subr.mxu0 0.0
    %198 = vmatpush1.msra.mxu0 %v178
    %199 = vmatprep.subr.mxu0 0.0
    %200 = vmatpush1.msra.mxu0 %v177
    %201 = vmatprep.subr.mxu0 0.0
    %202 = vmatpush1.msra.mxu0 %v176
    %203 = vmatprep.subr.mxu0 0.0
    %204 = vmatpush1.msra.mxu0 %v175
    %205 = vmatprep.subr.mxu0 0.0
    %206 = vmatpush1.msra.mxu0 %v174
    %207 = vmatprep.subr.mxu0 0.0
    %208 = vmatpush1.msra.mxu0 %v173
    %209 = vmatprep.subr.mxu0 0.0
    %210 = vmatpush1.msra.mxu0 %v172
    %211 = vmatprep.subr.mxu0 0.0
    %212 = vmatpush1.msra.mxu0 %v171
    %213 = vmatprep.subr.mxu0 0.0
    %214 = vmatpush1.msra.mxu0 %v170
    %215 = vmatprep.subr.mxu0 0.0
    %216 = vmatpush1.msra.mxu0 %v169
    %217 = vmatprep.subr.mxu0 0.0
    %218 = vmatpush1.msra.mxu0 %v168
    %219 = vmatprep.subr.mxu0 0.0
    %220 = vmatpush1.msra.mxu0 %v167
    %221 = vmatprep.subr.mxu0 0.0
    %222 = vmatpush2.msra.mxu0 0.0
    %223 = vmatprep.subr.mxu0 0.0
    %224 = vmatpush2.msra.mxu0 0.0
    %225 = vmatprep.subr.mxu0 0.0
    %226 = vmatpush2.msra.mxu0 0.0
    %227 = vmatprep.subr.mxu0 0.0
    %228 = vmatpush2.msra.mxu0 0.0
    %229 = vmatprep.subr.mxu0 0.0
    %230 = vmatpush2.msra.mxu0 0.0
    %231 = vmatprep.subr.mxu0 0.0
    %232 = vmatpush2.msra.mxu0 0.0
    %233 = vmatprep.subr.mxu0 0.0
    %234 = vmatpush2.msra.mxu0 0.0
    %235 = vmatprep.subr.mxu0 0.0
    %236 = vmatpush2.msra.mxu0 0.0
    %237 = vmatprep.subr.mxu0 0.0
    %238 = vmatpush2.msra.mxu0 0.0
    %239 = vmatprep.subr.mxu0 0.0
    %240 = vmatpush2.msra.mxu0 0.0
    %241 = vmatprep.subr.mxu0 0.0
    %242 = vmatpush2.msra.mxu0 0.0
    %243 = vmatprep.subr.mxu0 0.0
    %244 = vmatpush2.msra.mxu0 0.0
    %245 = vmatprep.subr.mxu0 0.0
    %246 = vmatpush2.msra.mxu0 0.0
    %247 = vmatprep.subr.mxu0 0.0
    %248 = vmatpush2.msra.mxu0 0.0
    %249 = vmatprep.subr.mxu0 0.0
    %250 = vmatpush2.msra.mxu0 0.0
    %251 = vmatprep.subr.mxu0 0.0
    %252 = vmatpush2.msra.mxu0 0.0
    %253 = vmatprep.mubr.f32.mxu0 0.0
    %254 = vmatmul.mubr.f32.gmra.mxu0 %v166
    %v255 = vpop.f32.mrf.mxu0
    %v256 = vadd.f32 %v187, %v255
    %v257 = vpop.f32.mrf.mxu0
    %258 = vdwg.mxu0
    %v259 = vtanh.pop %v256
    %v260 = vld [vmem:[#allocation8] sm:$0xff]
    %v261 = vld [vmem:[#allocation8 + $0x8] sm:$0xff]
    %v262 = vld [vmem:[#allocation8 + $0x10] sm:$0xff]
    %v263 = vld [vmem:[#allocation8 + $0x18] sm:$0xff]
    %v264 = vld [vmem:[#allocation8 + $0x20] sm:$0xff]
    %v265 = vld [vmem:[#allocation8 + $0x28] sm:$0xff]
    %v266 = vld [vmem:[#allocation8 + $0x30] sm:$0xff]
    %v267 = vld [vmem:[#allocation8 + $0x38] sm:$0xff]
    %v268 = vld [vmem:[#allocation8 + $0x40] sm:$0xff]
    %v269 = vld [vmem:[#allocation8 + $0x48] sm:$0xff]
    %v270 = vld [vmem:[#allocation8 + $0x50] sm:$0xff]
    %v271 = vld [vmem:[#allocation8 + $0x58] sm:$0xff]
    %v272 = vld [vmem:[#allocation8 + $0x60] sm:$0xff]
    %v273 = vld [vmem:[#allocation8 + $0x68] sm:$0xff]
    %v274 = vld [vmem:[#allocation8 + $0x70] sm:$0xff]
    %v275 = vld [vmem:[#allocation8 + $0x78] sm:$0xff]
    %v277 = vlaneseq
    %v278 = vshrl.u32 %v277, 7
    %v279 = vsub.s32 0, %v278
    %v280 = vrot.slane %v82, %v279
    %282 = vmatprep.subr.mxu0 0.0
    %283 = vmatpush1.msra.mxu0 %v275
    %284 = vmatprep.subr.mxu0 0.0
    %285 = vmatpush1.msra.mxu0 %v274
    %286 = vmatprep.subr.mxu0 0.0
    %287 = vmatpush1.msra.mxu0 %v273
    %288 = vmatprep.subr.mxu0 0.0
    %289 = vmatpush1.msra.mxu0 %v272
    %290 = vmatprep.subr.mxu0 0.0
    %291 = vmatpush1.msra.mxu0 %v271
    %292 = vmatprep.subr.mxu0 0.0
    %293 = vmatpush1.msra.mxu0 %v270
    %294 = vmatprep.subr.mxu0 0.0
    %295 = vmatpush1.msra.mxu0 %v269
    %296 = vmatprep.subr.mxu0 0.0
    %297 = vmatpush1.msra.mxu0 %v268
    %298 = vmatprep.subr.mxu0 0.0
    %299 = vmatpush1.msra.mxu0 %v267
    %300 = vmatprep.subr.mxu0 0.0
    %301 = vmatpush1.msra.mxu0 %v266
    %302 = vmatprep.subr.mxu0 0.0
    %303 = vmatpush1.msra.mxu0 %v265
    %304 = vmatprep.subr.mxu0 0.0
    %305 = vmatpush1.msra.mxu0 %v264
    %306 = vmatprep.subr.mxu0 0.0
    %307 = vmatpush1.msra.mxu0 %v263
    %308 = vmatprep.subr.mxu0 0.0
    %309 = vmatpush1.msra.mxu0 %v262
    %310 = vmatprep.subr.mxu0 0.0
    %311 = vmatpush1.msra.mxu0 %v261
    %312 = vmatprep.subr.mxu0 0.0
    %313 = vmatpush1.msra.mxu0 %v260
    %314 = vmatprep.subr.mxu0 0.0
    %315 = vmatpush2.msra.mxu0 0.0
    %316 = vmatprep.subr.mxu0 0.0
    %317 = vmatpush2.msra.mxu0 0.0
    %318 = vmatprep.subr.mxu0 0.0
    %319 = vmatpush2.msra.mxu0 0.0
    %320 = vmatprep.subr.mxu0 0.0
    %321 = vmatpush2.msra.mxu0 0.0
    %322 = vmatprep.subr.mxu0 0.0
    %323 = vmatpush2.msra.mxu0 0.0
    %324 = vmatprep.subr.mxu0 0.0
    %325 = vmatpush2.msra.mxu0 0.0
    %326 = vmatprep.subr.mxu0 0.0
    %327 = vmatpush2.msra.mxu0 0.0
    %328 = vmatprep.subr.mxu0 0.0
    %329 = vmatpush2.msra.mxu0 0.0
    %330 = vmatprep.subr.mxu0 0.0
    %331 = vmatpush2.msra.mxu0 0.0
    %332 = vmatprep.subr.mxu0 0.0
    %333 = vmatpush2.msra.mxu0 0.0
    %334 = vmatprep.subr.mxu0 0.0
    %335 = vmatpush2.msra.mxu0 0.0
    %336 = vmatprep.subr.mxu0 0.0
    %337 = vmatpush2.msra.mxu0 0.0
    %338 = vmatprep.subr.mxu0 0.0
    %339 = vmatpush2.msra.mxu0 0.0
    %340 = vmatprep.subr.mxu0 0.0
    %341 = vmatpush2.msra.mxu0 0.0
    %342 = vmatprep.subr.mxu0 0.0
    %343 = vmatpush2.msra.mxu0 0.0
    %344 = vmatprep.subr.mxu0 0.0
    %345 = vmatpush2.msra.mxu0 0.0
    %346 = vmatprep.mubr.f32.mxu0 0.0
    %347 = vmatmul.mubr.f32.gmra.mxu0 %v259
    %v348 = vpop.f32.mrf.mxu0
    %v349 = vadd.f32 %v280, %v348
    %v350 = vpop.f32.mrf.mxu0
    %351 = vdwg.mxu0
    %v352 = vmax.f32 %v349, 0.0
    %v353 = vand.u32 2147483647, %v349
    %v354 = vsub.f32 0.0, %v353
    %v355 = vmul.f32 %v354, 1.442695
    %v356 = vpow.pop %v355
    %v357 = vadd.f32 %v356, 1.0
    %v358 = vlog2.pop %v357
    %v359 = vmul.f32 %v358, 0.6931472
    %v360 = vmul.f32 -0.5, %v356
    %v361 = vadd.f32 %v360, 1.0
    %v362 = vmul.f32 %v361, %v356
    %v363 = vand.u32 2147483647, %v356
    %vm364 = vcmp.lt.f32.partialorder %v363, 0.0004427343
    %v365 = vsel %vm364, %v362, %v359
    %v366 = vadd.f32 %v352, %v365
    %v367 = vlaneseq
    %v368 = vand.u32 %v367, 127
    %vm369 = vcmp.lt.s32.totalorder %v368, 64
    %v370 = vsel %vm369, %v349, %v366
    %371 = vst [vmem:[#allocation10] sm:$0xff] %v370
    // Predicated region
    $region46: #{tpu_custom_call.1} parent=1 // pred_check
      _
    $region47: #{tpu_custom_call.1} parent=1 // pred_check_branch
      %373 = sbr.rel (0) target = $region49
    $region48: #{tpu_custom_call.1} parent=1 // pred_region
      %s375 = ssub.s32 128, 128
      %376 = vsyncadd [#allocation4], %s375
      %s378 = sshll.u32 [#allocation10], 4
      %s379 = int_to_ptr.vmem [resolvable:$true] %s378
      %381 = dma.vmem_to_hbm [thread:$0]  %s379, 128, %s7, [#allocation4]
    $region49: #{tpu_custom_call.1} parent=1 // pred_fallthru
      _
    // Predicated region
    $region50: #{tpu_custom_call.1} parent=1 // pred_check
      _
    $region51: #{tpu_custom_call.1} parent=1 // pred_check_branch
      %383 = sbr.rel (0) target = $region53
    $region52: #{tpu_custom_call.1} parent=1 // pred_region
      %384 = dma.done [#allocation4], 128
    $region53: #{tpu_custom_call.1} parent=1 // pred_fallthru
      _
    %385 = vsyncpa [#allocation3], 1
    %386 = vsyncpa [#allocation6], 1
    %387 = vsyncpa [#allocation9], 1
    %388 = vsyncpa [#allocation4], 1

</llo_original>
